<compile_context>
chip_gen: v7x
topology: tpu7x:2x2x1
jax: 0.10.0
libtpu: 0.0.40
codegen_flags: <defaults>
</compile_context>

<pallas_src>
import jax
import jax.numpy as jnp
from jax.experimental import pallas as pl
from jax.experimental.pallas import tpu as pltpu

LANE = 128
SUBLANE = 8


def _round_up(x, m):
    return ((x + m - 1) // m) * m


def _const_spec(shape):
    # Weights/biases have a constant index_map (fetched once, VMEM-resident).
    # Single-buffer them so they don't pay a 2x VMEM footprint.
    try:
        return pl.BlockSpec(shape, lambda i: (0, 0),
                            pipeline_mode=pl.Buffered(buffer_count=1))
    except TypeError:  # fallback if pipeline_mode/Buffered kwarg is unavailable
        return pl.BlockSpec(shape, lambda i: (0, 0))


def mlp_kernel(x_ref, w1_ref, b1_ref, w2_ref, b2_ref, w3_ref, b3_ref, out_ref):
    cdt = w1_ref.dtype  # MXU compute dtype (bf16 by default)

    x = x_ref[...].astype(cdt)  # [TB, K_pad]

    # linear1 + ReLU   (f32 accumulate, f32 bias, then back to compute dtype)
    h1 = jnp.dot(x, w1_ref[...], preferred_element_type=jnp.float32) + b1_ref[...]
    h1 = jnp.maximum(h1, 0.0).astype(cdt)

    # linear2 + ReLU
    h2 = jnp.dot(h1, w2_ref[...], preferred_element_type=jnp.float32) + b2_ref[...]
    h2 = jnp.maximum(h2, 0.0).astype(cdt)

    # output layer: lane-dense dot (w3 padded to 128 cols), narrow store of the
    # true output columns only (padded cols are zero-weight/zero-bias garbage).
    out = jnp.dot(h2, w3_ref[...], preferred_element_type=jnp.float32) + b3_ref[...]
    out_ref[...] = out[:, : out_ref.shape[1]].astype(out_ref.dtype)


def prepare_params(params, *, compute_dtype=jnp.bfloat16):
    """One-time parameter prep: zero-pad feature axes and cast weights to the
    MXU compute dtype. Do NOT call per forward step.

    params: dict with wK [in, out] and bK [1, out] (f32).
    """
    w1, b1 = params["w1"], params["b1"]
    w2, b2 = params["w2"], params["b2"]
    w3, b3 = params["w3"], params["b3"]

    K, H = w1.shape
    N = w3.shape[1]
    K_pad = _round_up(K, SUBLANE)   # sublane grain only (review: don't pad K to 128)
    H_pad = _round_up(H, LANE)      # lane-dense hidden axis
    N_pad = _round_up(N, LANE)      # lane-dense for the final dot (store is narrow)

    cdt = compute_dtype
    f32 = jnp.float32
    # Zero padding is exact: padded x cols meet zero weight rows, padded hidden
    # /output cols have zero weights + zero bias, ReLU(0) = 0.
    w1p = jnp.zeros((K_pad, H_pad), cdt).at[:K, :H].set(w1.astype(cdt))
    b1p = jnp.zeros((1, H_pad), f32).at[:, :H].set(b1)
    w2p = jnp.zeros((H_pad, H_pad), cdt).at[:H, :H].set(w2.astype(cdt))
    b2p = jnp.zeros((1, H_pad), f32).at[:, :H].set(b2)
    w3p = jnp.zeros((H_pad, N_pad), cdt).at[:H, :N].set(w3.astype(cdt))
    b3p = jnp.zeros((1, N_pad), f32).at[:, :N].set(b3)

    return {
        "w1": w1p, "b1": b1p, "w2": w2p, "b2": b2p, "w3": w3p, "b3": b3p,
        "input_dims": K, "hidden_dims": H, "output_dims": N,
    }


def mlp_forward(x, prep, *, batch_tile=512):
    """Fused MLP forward. x: [B, input_dims] f32. Returns [B] if output_dims==1
    (mirrors torch's .squeeze(1)), else [B, output_dims]."""
    w1, b1 = prep["w1"], prep["b1"]
    w2, b2 = prep["w2"], prep["b2"]
    w3, b3 = prep["w3"], prep["b3"]
    K, N = prep["input_dims"], prep["output_dims"]

    B = x.shape[0]
    assert x.shape[1] == K
    K_pad, H_pad = w1.shape
    N_pad = w3.shape[1]

    # Balanced batch tiling: pad B only to the sublane grain, then split into
    # roughly-equal tiles (avoids ~2x waste when B is just above batch_tile).
    B8 = _round_up(B, SUBLANE)
    num_tiles = pl.cdiv(B8, batch_tile)
    if B8 >= 2 * SUBLANE:
        num_tiles = max(num_tiles, 2)  # keep both v7x TensorCores busy
    TB = _round_up(pl.cdiv(B8, num_tiles), SUBLANE)
    B_pad = TB * num_tiles
    grid = (num_tiles,)

    x = x.astype(jnp.float32)
    if B_pad != B or K_pad != K:
        xp = jnp.zeros((B_pad, K_pad), jnp.float32).at[:B, :K].set(x)
    else:
        xp = x

    # VMEM budget: single-buffered resident weights + double-buffered x/out
    # tiles + headroom for f32/bf16 intermediates.
    w_bytes = sum(int(a.size) * a.dtype.itemsize for a in (w1, w2, w3))
    b_bytes = sum(int(a.size) * a.dtype.itemsize for a in (b1, b2, b3))
    act_bytes = 2 * TB * K_pad * 4 + 2 * TB * N * 4
    tmp_bytes = 6 * TB * H_pad * 4
    need = 2 * (w_bytes + b_bytes) + act_bytes + tmp_bytes + (2 << 20)
    vmem_limit = int(min(max(need, 32 << 20), 100 << 20))

    cost = pl.CostEstimate(
        flops=2 * B_pad * (K_pad * H_pad + H_pad * H_pad + H_pad * N_pad),
        transcendentals=0,
        bytes_accessed=int(B_pad * K_pad * 4 + w_bytes + b_bytes + B_pad * N * 4),
    )

    # TODO(synk): for very large hidden_dims (f32 w2 hits 16 MiB at H=2048,
    # 64 MiB at H=4096) add an H/K-reduction grid axis with a VMEM accumulator
    # instead of keeping full weight matrices resident (earlier cutoff on v7x's
    # 64 MiB VMEM).
    out = pl.pallas_call(
        mlp_kernel,
        out_shape=jax.ShapeDtypeStruct((B_pad, N), jnp.float32),
        grid=grid,
        in_specs=[
            pl.BlockSpec((TB, K_pad), lambda i: (i, 0)),   # streamed activation tile
            _const_spec((K_pad, H_pad)), _const_spec((1, H_pad)),
            _const_spec((H_pad, H_pad)), _const_spec((1, H_pad)),
            _const_spec((H_pad, N_pad)), _const_spec((1, N_pad)),
        ],
        out_specs=pl.BlockSpec((TB, N), lambda i: (i, 0)),  # narrow (true-N) writeback
        compiler_params=pltpu.CompilerParams(
            dimension_semantics=("parallel",),
            vmem_limit_bytes=vmem_limit,
        ),
        cost_estimate=cost,
    )(xp, w1, b1, w2, b2, w3, b3)

    out = out[:B]
    # Mirror torch's `out.squeeze(1)`: drop axis 1 only when it has size 1.
    if N == 1:
        out = jnp.squeeze(out, axis=1)
    return out


def init_params(key, input_dims, hidden_dims, output_dims):
    """Deterministic synthetic init (uniform, similar scale to nn.Linear default)."""
    ks = jax.random.split(key, 6)

    def lin(kw, kb, fan_in, fan_out):
        bound = 1.0 / jnp.sqrt(fan_in)
        w = jax.random.uniform(kw, (fan_in, fan_out), jnp.float32, -bound, bound)
        b = jax.random.uniform(kb, (1, fan_out), jnp.float32, -bound, bound)
        return w, b

    w1, b1 = lin(ks[0], ks[1], input_dims, hidden_dims)
    w2, b2 = lin(ks[2], ks[3], hidden_dims, hidden_dims)
    w3, b3 = lin(ks[4], ks[5], hidden_dims, output_dims)
    return {"w1": w1, "b1": b1, "w2": w2, "b2": b2, "w3": w3, "b3": b3}


if __name__ == "__main__":
    input_dims, hidden_dims, output_dims = 4, 32, 1
    batch = 8

    key = jax.random.PRNGKey(0)
    k_params, k_x = jax.random.split(key)
    params = init_params(k_params, input_dims, hidden_dims, output_dims)
    x = jax.random.normal(k_x, (batch, input_dims), jnp.float32)

    prep = prepare_params(params, compute_dtype=jnp.bfloat16)  # one-time prep
    out = mlp_forward(x, prep)
    out = jax.block_until_ready(out)
    assert out.shape == (batch,)

    # Same-math reference: bf16 operands into each dot, f32 accumulation.
    cdt = jnp.bfloat16
    h1 = jnp.maximum(jnp.dot(x.astype(cdt), params["w1"].astype(cdt),
                             preferred_element_type=jnp.float32) + params["b1"], 0.0)
    h2 = jnp.maximum(jnp.dot(h1.astype(cdt), params["w2"].astype(cdt),
                             preferred_element_type=jnp.float32) + params["b2"], 0.0)
    ref_same = jnp.squeeze(jnp.dot(h2.astype(cdt), params["w3"].astype(cdt),
                                   preferred_element_type=jnp.float32) + params["b3"], axis=1)
    assert jnp.allclose(out, ref_same, atol=2e-3, rtol=2e-3)

    # Full-f32 reference (the torch module's math) — loose check for bf16 error.
    h1f = jnp.maximum(x @ params["w1"] + params["b1"], 0.0)
    h2f = jnp.maximum(h1f @ params["w2"] + params["b2"], 0.0)
    ref_f32 = jnp.squeeze(h2f @ params["w3"] + params["b3"], axis=1)
    assert jnp.allclose(out, ref_f32, atol=5e-2, rtol=5e-2)

    print("KERNEL_OK")
</pallas_src>

<mosaic_0001>
module attributes {stable_mosaic.version = 11 : i64} {
  func.func @mlp_kernel(%arg0: i32, %arg1: memref<8x8xf32, #tpu.memory_space<vmem>>, %arg2: memref<8x128xbf16, #tpu.memory_space<vmem>>, %arg3: memref<1x128xf32, #tpu.memory_space<vmem>>, %arg4: memref<128x128xbf16, #tpu.memory_space<vmem>>, %arg5: memref<1x128xf32, #tpu.memory_space<vmem>>, %arg6: memref<128x128xbf16, #tpu.memory_space<vmem>>, %arg7: memref<1x128xf32, #tpu.memory_space<vmem>>, %arg8: memref<8x1xf32, #tpu.memory_space<vmem>>) attributes {dimension_semantics = [#tpu.dimension_semantics<parallel>], iteration_bounds = array<i64: 1>, scalar_prefetch = 0 : i64, scratch_operands = 0 : i64, tpu.core_type = #tpu.core_type<tc>, window_params = [{transform_indices = @transform_0, window_bounds = array<i64: 8, 8>}, {pipeline_mode = #tpu.pipeline_mode<synchronous>, transform_indices = @transform_1, window_bounds = array<i64: 8, 128>}, {pipeline_mode = #tpu.pipeline_mode<synchronous>, transform_indices = @transform_2, window_bounds = array<i64: 1, 128>}, {pipeline_mode = #tpu.pipeline_mode<synchronous>, transform_indices = @transform_3, window_bounds = array<i64: 128, 128>}, {pipeline_mode = #tpu.pipeline_mode<synchronous>, transform_indices = @transform_4, window_bounds = array<i64: 1, 128>}, {pipeline_mode = #tpu.pipeline_mode<synchronous>, transform_indices = @transform_5, window_bounds = array<i64: 128, 128>}, {pipeline_mode = #tpu.pipeline_mode<synchronous>, transform_indices = @transform_6, window_bounds = array<i64: 1, 128>}, {transform_indices = @transform_7, window_bounds = array<i64: 8, 1>}]} {
    %c0 = arith.constant 0 : index
    %c0_0 = arith.constant 0 : index
    %0 = vector.load %arg1[%c0, %c0_0] : memref<8x8xf32, #tpu.memory_space<vmem>>, vector<8x8xf32>
    %1 = arith.truncf %0 : vector<8x8xf32> to vector<8x8xbf16>
    %c0_1 = arith.constant 0 : index
    %c0_2 = arith.constant 0 : index
    %2 = vector.load %arg2[%c0_1, %c0_2] : memref<8x128xbf16, #tpu.memory_space<vmem>>, vector<8x128xbf16>
    %cst = arith.constant dense<0.000000e+00> : vector<8x128xf32>
    %3 = tpu.matmul %1, %2, %cst {dimension_numbers = #tpu.dot_dimension_numbers<[1], [0], [0], [1], [0, 0, 1, 1], [], []>} : vector<8x8xbf16>, vector<8x128xbf16>, vector<8x128xf32> -> vector<8x128xf32>
    %c0_3 = arith.constant 0 : index
    %c0_4 = arith.constant 0 : index
    %4 = vector.load %arg3[%c0_3, %c0_4] : memref<1x128xf32, #tpu.memory_space<vmem>>, vector<1x128xf32>
    %5 = vector.broadcast %4 : vector<1x128xf32> to vector<8x128xf32>
    %6 = arith.addf %3, %5 : vector<8x128xf32>
    %cst_5 = arith.constant 0.000000e+00 : f32
    %7 = vector.broadcast %cst_5 : f32 to vector<8x128xf32>
    %8 = arith.maximumf %6, %7 : vector<8x128xf32>
    %9 = arith.truncf %8 : vector<8x128xf32> to vector<8x128xbf16>
    %c0_6 = arith.constant 0 : index
    %c0_7 = arith.constant 0 : index
    %10 = vector.load %arg4[%c0_6, %c0_7] : memref<128x128xbf16, #tpu.memory_space<vmem>>, vector<128x128xbf16>
    %cst_8 = arith.constant dense<0.000000e+00> : vector<8x128xf32>
    %11 = tpu.matmul %9, %10, %cst_8 {dimension_numbers = #tpu.dot_dimension_numbers<[1], [0], [0], [1], [0, 0, 1, 1], [], []>} : vector<8x128xbf16>, vector<128x128xbf16>, vector<8x128xf32> -> vector<8x128xf32>
    %c0_9 = arith.constant 0 : index
    %c0_10 = arith.constant 0 : index
    %12 = vector.load %arg5[%c0_9, %c0_10] : memref<1x128xf32, #tpu.memory_space<vmem>>, vector<1x128xf32>
    %13 = vector.broadcast %12 : vector<1x128xf32> to vector<8x128xf32>
    %14 = arith.addf %11, %13 : vector<8x128xf32>
    %cst_11 = arith.constant 0.000000e+00 : f32
    %15 = vector.broadcast %cst_11 : f32 to vector<8x128xf32>
    %16 = arith.maximumf %14, %15 : vector<8x128xf32>
    %17 = arith.truncf %16 : vector<8x128xf32> to vector<8x128xbf16>
    %c0_12 = arith.constant 0 : index
    %c0_13 = arith.constant 0 : index
    %18 = vector.load %arg6[%c0_12, %c0_13] : memref<128x128xbf16, #tpu.memory_space<vmem>>, vector<128x128xbf16>
    %cst_14 = arith.constant dense<0.000000e+00> : vector<8x128xf32>
    %19 = tpu.matmul %17, %18, %cst_14 {dimension_numbers = #tpu.dot_dimension_numbers<[1], [0], [0], [1], [0, 0, 1, 1], [], []>} : vector<8x128xbf16>, vector<128x128xbf16>, vector<8x128xf32> -> vector<8x128xf32>
    %c0_15 = arith.constant 0 : index
    %c0_16 = arith.constant 0 : index
    %20 = vector.load %arg7[%c0_15, %c0_16] : memref<1x128xf32, #tpu.memory_space<vmem>>, vector<1x128xf32>
    %21 = vector.broadcast %20 : vector<1x128xf32> to vector<8x128xf32>
    %22 = arith.addf %19, %21 : vector<8x128xf32>
    %23 = vector.extract_strided_slice %22 {offsets = [0, 0], sizes = [8, 1], strides = [1, 1]} : vector<8x128xf32> to vector<8x1xf32>
    %c0_17 = arith.constant 0 : index
    %c0_18 = arith.constant 0 : index
    %24 = vector.load %arg8[%c0_17, %c0_18] : memref<8x1xf32, #tpu.memory_space<vmem>>, vector<8x1xf32>
    tpu.vector_store %arg8[%c0_17, %c0_18], %23 {strides = array<i32>} : memref<8x1xf32, #tpu.memory_space<vmem>>, vector<8x1xf32>,
    return
  }
  func.func @transform_0(%arg0: i32) -> (i32, i32) {
    %c0_i32 = arith.constant 0 : i32
    %c0_i32_0 = arith.constant 0 : i32
    return %arg0, %c0_i32 : i32, i32
  }
  func.func @transform_1(%arg0: i32) -> (i32, i32) {
    %c0_i32 = arith.constant 0 : i32
    %c0_i32_0 = arith.constant 0 : i32
    %c0_i32_1 = arith.constant 0 : i32
    return %c0_i32, %c0_i32_0 : i32, i32
  }
  func.func @transform_2(%arg0: i32) -> (i32, i32) {
    %c0_i32 = arith.constant 0 : i32
    %c0_i32_0 = arith.constant 0 : i32
    %c0_i32_1 = arith.constant 0 : i32
    return %c0_i32, %c0_i32_0 : i32, i32
  }
  func.func @transform_3(%arg0: i32) -> (i32, i32) {
    %c0_i32 = arith.constant 0 : i32
    %c0_i32_0 = arith.constant 0 : i32
    %c0_i32_1 = arith.constant 0 : i32
    return %c0_i32, %c0_i32_0 : i32, i32
  }
  func.func @transform_4(%arg0: i32) -> (i32, i32) {
    %c0_i32 = arith.constant 0 : i32
    %c0_i32_0 = arith.constant 0 : i32
    %c0_i32_1 = arith.constant 0 : i32
    return %c0_i32, %c0_i32_0 : i32, i32
  }
  func.func @transform_5(%arg0: i32) -> (i32, i32) {
    %c0_i32 = arith.constant 0 : i32
    %c0_i32_0 = arith.constant 0 : i32
    %c0_i32_1 = arith.constant 0 : i32
    return %c0_i32, %c0_i32_0 : i32, i32
  }
  func.func @transform_6(%arg0: i32) -> (i32, i32) {
    %c0_i32 = arith.constant 0 : i32
    %c0_i32_0 = arith.constant 0 : i32
    %c0_i32_1 = arith.constant 0 : i32
    return %c0_i32, %c0_i32_0 : i32, i32
  }
  func.func @transform_7(%arg0: i32) -> (i32, i32) {
    %c0_i32 = arith.constant 0 : i32
    %c0_i32_0 = arith.constant 0 : i32
    return %arg0, %c0_i32 : i32, i32
  }
}

</mosaic_0001>

<llo_original>
// kernel: tpu_custom_call.1
$region0: #{tpu_custom_call.1}
  #allocation0 [shape = 'u32[]', space=smem, size = 0x4, offset = 0x4, fixed_abs, tag = 'smem constant byte address 0x4 - core index']
  #allocation1 [shape = 'u32[144,128]{1,0:T(1,128)}', space=vmem, size = 0x12000, scoped, tag = 'internal scratch']
  %s0 = inlined_call_operand.hbm [shape: f32[8,8], index: 0, kind: input, shape index: {}]
  %s1 = inlined_call_operand.hbm [shape: bf16[8,128], index: 1, kind: input, shape index: {}]
  %s2 = inlined_call_operand.vmem [shape: f32[1,128], index: 2, kind: input, shape index: {}]
  %s3 = inlined_call_operand.hbm [shape: bf16[128,128], index: 3, kind: input, shape index: {}]
  %s4 = inlined_call_operand.vmem [shape: f32[1,128], index: 4, kind: input, shape index: {}]
  %s5 = inlined_call_operand.hbm [shape: bf16[128,128], index: 5, kind: input, shape index: {}]
  %s6 = inlined_call_operand.vmem [shape: f32[1,128], index: 6, kind: input, shape index: {}]
  %s7 = inlined_call_operand.vmem [shape: f32[8,1], index: 7, kind: output, shape index: {}]
  %s8 = sld [smem:[#allocation0]]
  $region54: #{tpu_custom_call.1} parent=0
    _
  %s10 = ssub.s32 1, %s8
  %s11 = scalar_select 0, %s10, %s8
  $region1: #{tpu_custom_call.1} parent=0
    #allocation2 [shape = 'u8[4096]{0}', space=vmem, size = 0x1000, scoped, tag = 'input window, operand 0, single buffered']
    #allocation3 [shape = 's32[1]{0}', space=sflag, size = 0x4, scoped, tag = 'scoped memory for tpu_custom_call.1']
    #allocation4 [shape = 'u8[2048]{0}', space=vmem, size = 0x800, scoped, tag = 'input window, operand 1, single buffered']
    #allocation5 [shape = 's32[1]{0}', space=sflag, size = 0x4, scoped, tag = 'scoped memory for tpu_custom_call.1']
    #allocation6 [shape = 'u8[32768]{0}', space=vmem, size = 0x8000, scoped, tag = 'input window, operand 3, single buffered']
    #allocation7 [shape = 'u8[32768]{0}', space=vmem, size = 0x8000, scoped, tag = 'input window, operand 5, single buffered']
    #allocation8 [shape = 's32[1]{0}', space=sflag, size = 0x4, scoped, tag = 'scoped memory for tpu_custom_call.1']
    %12 = vsyncpa [#allocation3], 0
    %13 = vsyncpa [#allocation5], 0
    %14 = vsyncpa [#allocation8], 0
    // Predicated region
    $region2: #{tpu_custom_call.1} parent=1 // pred_check
      _
    $region3: #{tpu_custom_call.1} parent=1 // pred_check_branch
      %16 = sbr.rel (0) target = $region5
    $region4: #{tpu_custom_call.1} parent=1 // pred_region
      %s18 = ssub.s32 128, 128
      %19 = vsyncadd [#allocation3], %s18
      %s21 = sshll.u32 [#allocation2], 4
      %s22 = int_to_ptr.vmem [resolvable:$true] %s21
      %24 = dma.hbm_to_vmem [thread:$0]  %s0, 128, %s22, [#allocation3]
    $region5: #{tpu_custom_call.1} parent=1 // pred_fallthru
      _
    // Predicated region
    $region6: #{tpu_custom_call.1} parent=1 // pred_check
      _
    $region7: #{tpu_custom_call.1} parent=1 // pred_check_branch
      %26 = sbr.rel (0) target = $region9
    $region8: #{tpu_custom_call.1} parent=1 // pred_region
      %s28 = ssub.s32 64, 64
      %29 = vsyncadd [#allocation5], %s28
      %s31 = sshll.u32 [#allocation4], 4
      %s32 = int_to_ptr.vmem [resolvable:$true] %s31
      %34 = dma.hbm_to_vmem [thread:$0]  %s1, 64, %s32, [#allocation5]
    $region9: #{tpu_custom_call.1} parent=1 // pred_fallthru
      _
    // Predicated region
    $region10: #{tpu_custom_call.1} parent=1 // pred_check
      _
    $region11: #{tpu_custom_call.1} parent=1 // pred_check_branch
      %36 = sbr.rel (0) target = $region13
    $region12: #{tpu_custom_call.1} parent=1 // pred_region
      _
    $region13: #{tpu_custom_call.1} parent=1 // pred_fallthru
      _
    // Predicated region
    $region14: #{tpu_custom_call.1} parent=1 // pred_check
      _
    $region15: #{tpu_custom_call.1} parent=1 // pred_check_branch
      %38 = sbr.rel (0) target = $region17
    $region16: #{tpu_custom_call.1} parent=1 // pred_region
      %s40 = ssub.s32 1024, 1024
      %41 = vsyncadd [#allocation5], %s40
      %s42 = sshll.u32 [#allocation6], 4
      %s43 = int_to_ptr.vmem [resolvable:$true] %s42
      %48 = dma.hbm_to_vmem [thread:$0]  %s3, 1024, %s43, [#allocation5], 64, 64, 4
    $region17: #{tpu_custom_call.1} parent=1 // pred_fallthru
      _
    // Predicated region
    $region18: #{tpu_custom_call.1} parent=1 // pred_check
      _
    $region19: #{tpu_custom_call.1} parent=1 // pred_check_branch
      %50 = sbr.rel (0) target = $region21
    $region20: #{tpu_custom_call.1} parent=1 // pred_region
      _
    $region21: #{tpu_custom_call.1} parent=1 // pred_fallthru
      _
    // Predicated region
    $region22: #{tpu_custom_call.1} parent=1 // pred_check
      _
    $region23: #{tpu_custom_call.1} parent=1 // pred_check_branch
      %52 = sbr.rel (0) target = $region25
    $region24: #{tpu_custom_call.1} parent=1 // pred_region
      %s54 = ssub.s32 1024, 1024
      %55 = vsyncadd [#allocation8], %s54
      %s56 = sshll.u32 [#allocation7], 4
      %s57 = int_to_ptr.vmem [resolvable:$true] %s56
      %62 = dma.hbm_to_vmem [thread:$0]  %s5, 1024, %s57, [#allocation8], 64, 64, 4
    $region25: #{tpu_custom_call.1} parent=1 // pred_fallthru
      _
    // Predicated region
    $region26: #{tpu_custom_call.1} parent=1 // pred_check
      _
    $region27: #{tpu_custom_call.1} parent=1 // pred_check_branch
      %64 = sbr.rel (0) target = $region29
    $region28: #{tpu_custom_call.1} parent=1 // pred_region
      _
    $region29: #{tpu_custom_call.1} parent=1 // pred_fallthru
      _
    // Predicated region
    $region30: #{tpu_custom_call.1} parent=1 // pred_check
      _
    $region31: #{tpu_custom_call.1} parent=1 // pred_check_branch
      %66 = sbr.rel (0) target = $region33
    $region32: #{tpu_custom_call.1} parent=1 // pred_region
      %67 = dma.done [#allocation3], 128
    $region33: #{tpu_custom_call.1} parent=1 // pred_fallthru
      _
    // Predicated region
    $region34: #{tpu_custom_call.1} parent=1 // pred_check
      _
    $region35: #{tpu_custom_call.1} parent=1 // pred_check_branch
      %69 = sbr.rel (0) target = $region37
    $region36: #{tpu_custom_call.1} parent=1 // pred_region
      %70 = dma.done [#allocation5], 64
    $region37: #{tpu_custom_call.1} parent=1 // pred_fallthru
      _
    // Predicated region
    $region38: #{tpu_custom_call.1} parent=1 // pred_check
      _
    $region39: #{tpu_custom_call.1} parent=1 // pred_check_branch
      %72 = sbr.rel (0) target = $region41
    $region40: #{tpu_custom_call.1} parent=1 // pred_region
      %73 = dma.done [#allocation5], 1024
    $region41: #{tpu_custom_call.1} parent=1 // pred_fallthru
      _
    // Predicated region
    $region42: #{tpu_custom_call.1} parent=1 // pred_check
      _
    $region43: #{tpu_custom_call.1} parent=1 // pred_check_branch
      %75 = sbr.rel (0) target = $region45
    $region44: #{tpu_custom_call.1} parent=1 // pred_region
      %76 = dma.done [#allocation8], 1024
    $region45: #{tpu_custom_call.1} parent=1 // pred_fallthru
      _
    %v78 = vld [vmem:[#allocation2] sm:$0xff]
    %v79 = vpack.c.bf16 %v78, %v78
    %v80 = vld [vmem:[#allocation4] sm:$0xf]
    %v81 = vld [vmem:[%s2] sm:$0x1]
    %v83 = vlaneseq
    %v84 = vshrl.u32 %v83, 7
    %v85 = vsub.s32 0, %v84
    %v86 = vrot.slane %v81, %v85
    %vm88 = vcmask 64512
    %v90 = vsel %vm88, %v79, 0
    %vm92 = vcmask 1043456
    %v94 = vsel %vm92, %v80, 0
    %96 = vmatprep.subr.bf16.mxu0 0
    %97 = vmatpush1.bf16.msra.mxu0 %v94
    %98 = vmatprep.subr.bf16.mxu0 0
    %99 = vmatpush1.bf16.msra.mxu0 0
    %100 = vmatprep.subr.bf16.mxu0 0
    %101 = vmatpush1.bf16.msra.mxu0 0
    %102 = vmatprep.subr.bf16.mxu0 0
    %103 = vmatpush1.bf16.msra.mxu0 0
    %104 = vmatprep.subr.bf16.mxu0 0
    %105 = vmatpush1.bf16.msra.mxu0 0
    %106 = vmatprep.subr.bf16.mxu0 0
    %107 = vmatpush1.bf16.msra.mxu0 0
    %108 = vmatprep.subr.bf16.mxu0 0
    %109 = vmatpush1.bf16.msra.mxu0 0
    %110 = vmatprep.subr.bf16.mxu0 0
    %111 = vmatpush1.bf16.msra.mxu0 0
    %112 = vmatprep.subr.bf16.mxu0 0
    %113 = vmatpush1.bf16.msra.mxu0 0
    %114 = vmatprep.subr.bf16.mxu0 0
    %115 = vmatpush1.bf16.msra.mxu0 0
    %116 = vmatprep.subr.bf16.mxu0 0
    %117 = vmatpush1.bf16.msra.mxu0 0
    %118 = vmatprep.subr.bf16.mxu0 0
    %119 = vmatpush1.bf16.msra.mxu0 0
    %120 = vmatprep.subr.bf16.mxu0 0
    %121 = vmatpush1.bf16.msra.mxu0 0
    %122 = vmatprep.subr.bf16.mxu0 0
    %123 = vmatpush1.bf16.msra.mxu0 0
    %124 = vmatprep.subr.bf16.mxu0 0
    %125 = vmatpush1.bf16.msra.mxu0 0
    %126 = vmatprep.subr.bf16.mxu0 0
    %127 = vmatpush1.bf16.msra.mxu0 0
    %128 = vmatprep.mubr.bf16.mxu0 0
    %129 = vmatmul.mubr.bf16.gmra.mrb[0].mxu0 %v90
    %v130 = vpop.f32.mrb[0].mxu0
    %v131 = vadd.f32 %v86, %v130
    %v132 = vpop.f32.mrb[0].mxu0
    %v133 = vpop.f32.mrb[0].mxu0
    %v134 = vpop.f32.mrb[0].mxu0
    %135 = vdwg.mxu0
    %v136 = vmax.f32 %v131, 0.0
    %v137 = vpack.c.bf16 %v136, %v136
    %v138 = vld [vmem:[#allocation6] sm:$0xf]
    %v139 = vld [vmem:[#allocation6 + $0x4] sm:$0xf]
    %v140 = vld [vmem:[#allocation6 + $0x8] sm:$0xf]
    %v141 = vld [vmem:[#allocation6 + $0xc] sm:$0xf]
    %v142 = vld [vmem:[#allocation6 + $0x10] sm:$0xf]
    %v143 = vld [vmem:[#allocation6 + $0x14] sm:$0xf]
    %v144 = vld [vmem:[#allocation6 + $0x18] sm:$0xf]
    %v145 = vld [vmem:[#allocation6 + $0x1c] sm:$0xf]
    %v146 = vld [vmem:[#allocation6 + $0x20] sm:$0xf]
    %v147 = vld [vmem:[#allocation6 + $0x24] sm:$0xf]
    %v148 = vld [vmem:[#allocation6 + $0x28] sm:$0xf]
    %v149 = vld [vmem:[#allocation6 + $0x2c] sm:$0xf]
    %v150 = vld [vmem:[#allocation6 + $0x30] sm:$0xf]
    %v151 = vld [vmem:[#allocation6 + $0x34] sm:$0xf]
    %v152 = vld [vmem:[#allocation6 + $0x38] sm:$0xf]
    %v153 = vld [vmem:[#allocation6 + $0x3c] sm:$0xf]
    %v154 = vld [vmem:[%s4] sm:$0x1]
    %v156 = vlaneseq
    %v157 = vshrl.u32 %v156, 7
    %v158 = vsub.s32 0, %v157
    %v159 = vrot.slane %v154, %v158
    %v177 = vunpack.c.l.b16 %v138
    %v178 = vunpack.c.l.b16 %v139
    %v179 = vunpack.c.l.b16 %v140
    %v180 = vunpack.c.l.b16 %v141
    %v181 = vunpack.c.l.b16 %v142
    %v182 = vunpack.c.l.b16 %v143
    %v183 = vunpack.c.l.b16 %v144
    %v184 = vunpack.c.l.b16 %v145
    %v185 = vunpack.c.l.b16 %v146
    %v186 = vunpack.c.l.b16 %v147
    %v187 = vunpack.c.l.b16 %v148
    %v188 = vunpack.c.l.b16 %v149
    %v189 = vunpack.c.l.b16 %v150
    %v190 = vunpack.c.l.b16 %v151
    %v191 = vunpack.c.l.b16 %v152
    %v192 = vunpack.c.l.b16 %v153
    %v193 = vpack.c.b16 %v178, %v177
    %v194 = vpack.c.b16 %v180, %v179
    %v195 = vpack.c.b16 %v182, %v181
    %v196 = vpack.c.b16 %v184, %v183
    %v197 = vpack.c.b16 %v186, %v185
    %v198 = vpack.c.b16 %v188, %v187
    %v199 = vpack.c.b16 %v190, %v189
    %v200 = vpack.c.b16 %v192, %v191
    %209 = vmatprep.subr.bf16.mxu0 0
    %210 = vmatpush1.bf16.msra.mxu0 %v193
    %211 = vmatprep.subr.bf16.mxu0 0
    %212 = vmatpush1.bf16.msra.mxu0 %v194
    %213 = vmatprep.subr.bf16.mxu0 0
    %214 = vmatpush1.bf16.msra.mxu0 %v195
    %215 = vmatprep.subr.bf16.mxu0 0
    %216 = vmatpush1.bf16.msra.mxu0 %v196
    %217 = vmatprep.subr.bf16.mxu0 0
    %218 = vmatpush1.bf16.msra.mxu0 %v197
    %219 = vmatprep.subr.bf16.mxu0 0
    %220 = vmatpush1.bf16.msra.mxu0 %v198
    %221 = vmatprep.subr.bf16.mxu0 0
    %222 = vmatpush1.bf16.msra.mxu0 %v199
    %223 = vmatprep.subr.bf16.mxu0 0
    %224 = vmatpush1.bf16.msra.mxu0 %v200
    %225 = vmatprep.subr.bf16.mxu0 0
    %226 = vmatpush1.bf16.msra.mxu0 0
    %227 = vmatprep.subr.bf16.mxu0 0
    %228 = vmatpush1.bf16.msra.mxu0 0
    %229 = vmatprep.subr.bf16.mxu0 0
    %230 = vmatpush1.bf16.msra.mxu0 0
    %231 = vmatprep.subr.bf16.mxu0 0
    %232 = vmatpush1.bf16.msra.mxu0 0
    %233 = vmatprep.subr.bf16.mxu0 0
    %234 = vmatpush1.bf16.msra.mxu0 0
    %235 = vmatprep.subr.bf16.mxu0 0
    %236 = vmatpush1.bf16.msra.mxu0 0
    %237 = vmatprep.subr.bf16.mxu0 0
    %238 = vmatpush1.bf16.msra.mxu0 0
    %239 = vmatprep.subr.bf16.mxu0 0
    %240 = vmatpush1.bf16.msra.mxu0 0
    %241 = vmatprep.mubr.bf16.mxu0 0
    %242 = vmatmul.mubr.bf16.gmra.mrb[0].mxu0 %v137
    %v243 = vpop.f32.mrb[0].mxu0
    %v244 = vadd.f32 %v159, %v243
    %v245 = vpop.f32.mrb[0].mxu0
    %v246 = vpop.f32.mrb[0].mxu0
    %v247 = vpop.f32.mrb[0].mxu0
    %248 = vdwg.mxu0
    %v249 = vmax.f32 %v244, 0.0
    %v250 = vpack.c.bf16 %v249, %v249
    %v251 = vld [vmem:[#allocation7] sm:$0xf]
    %v252 = vld [vmem:[#allocation7 + $0x4] sm:$0xf]
    %v253 = vld [vmem:[#allocation7 + $0x8] sm:$0xf]
    %v254 = vld [vmem:[#allocation7 + $0xc] sm:$0xf]
    %v255 = vld [vmem:[#allocation7 + $0x10] sm:$0xf]
    %v256 = vld [vmem:[#allocation7 + $0x14] sm:$0xf]
    %v257 = vld [vmem:[#allocation7 + $0x18] sm:$0xf]
    %v258 = vld [vmem:[#allocation7 + $0x1c] sm:$0xf]
    %v259 = vld [vmem:[#allocation7 + $0x20] sm:$0xf]
    %v260 = vld [vmem:[#allocation7 + $0x24] sm:$0xf]
    %v261 = vld [vmem:[#allocation7 + $0x28] sm:$0xf]
    %v262 = vld [vmem:[#allocation7 + $0x2c] sm:$0xf]
    %v263 = vld [vmem:[#allocation7 + $0x30] sm:$0xf]
    %v264 = vld [vmem:[#allocation7 + $0x34] sm:$0xf]
    %v265 = vld [vmem:[#allocation7 + $0x38] sm:$0xf]
    %v266 = vld [vmem:[#allocation7 + $0x3c] sm:$0xf]
    %v267 = vld [vmem:[%s6] sm:$0x1]
    %v269 = vlaneseq
    %v270 = vshrl.u32 %v269, 7
    %v271 = vsub.s32 0, %v270
    %v272 = vrot.slane %v267, %v271
    %v290 = vunpack.c.l.b16 %v251
    %v291 = vunpack.c.l.b16 %v252
    %v292 = vunpack.c.l.b16 %v253
    %v293 = vunpack.c.l.b16 %v254
    %v294 = vunpack.c.l.b16 %v255
    %v295 = vunpack.c.l.b16 %v256
    %v296 = vunpack.c.l.b16 %v257
    %v297 = vunpack.c.l.b16 %v258
    %v298 = vunpack.c.l.b16 %v259
    %v299 = vunpack.c.l.b16 %v260
    %v300 = vunpack.c.l.b16 %v261
    %v301 = vunpack.c.l.b16 %v262
    %v302 = vunpack.c.l.b16 %v263
    %v303 = vunpack.c.l.b16 %v264
    %v304 = vunpack.c.l.b16 %v265
    %v305 = vunpack.c.l.b16 %v266
    %v306 = vpack.c.b16 %v291, %v290
    %v307 = vpack.c.b16 %v293, %v292
    %v308 = vpack.c.b16 %v295, %v294
    %v309 = vpack.c.b16 %v297, %v296
    %v310 = vpack.c.b16 %v299, %v298
    %v311 = vpack.c.b16 %v301, %v300
    %v312 = vpack.c.b16 %v303, %v302
    %v313 = vpack.c.b16 %v305, %v304
    %322 = vmatprep.subr.bf16.mxu0 0
    %323 = vmatpush1.bf16.msra.mxu0 %v306
    %324 = vmatprep.subr.bf16.mxu0 0
    %325 = vmatpush1.bf16.msra.mxu0 %v307
    %326 = vmatprep.subr.bf16.mxu0 0
    %327 = vmatpush1.bf16.msra.mxu0 %v308
    %328 = vmatprep.subr.bf16.mxu0 0
    %329 = vmatpush1.bf16.msra.mxu0 %v309
    %330 = vmatprep.subr.bf16.mxu0 0
    %331 = vmatpush1.bf16.msra.mxu0 %v310
    %332 = vmatprep.subr.bf16.mxu0 0
    %333 = vmatpush1.bf16.msra.mxu0 %v311
    %334 = vmatprep.subr.bf16.mxu0 0
    %335 = vmatpush1.bf16.msra.mxu0 %v312
    %336 = vmatprep.subr.bf16.mxu0 0
    %337 = vmatpush1.bf16.msra.mxu0 %v313
    %338 = vmatprep.subr.bf16.mxu0 0
    %339 = vmatpush1.bf16.msra.mxu0 0
    %340 = vmatprep.subr.bf16.mxu0 0
    %341 = vmatpush1.bf16.msra.mxu0 0
    %342 = vmatprep.subr.bf16.mxu0 0
    %343 = vmatpush1.bf16.msra.mxu0 0
    %344 = vmatprep.subr.bf16.mxu0 0
    %345 = vmatpush1.bf16.msra.mxu0 0
    %346 = vmatprep.subr.bf16.mxu0 0
    %347 = vmatpush1.bf16.msra.mxu0 0
    %348 = vmatprep.subr.bf16.mxu0 0
    %349 = vmatpush1.bf16.msra.mxu0 0
    %350 = vmatprep.subr.bf16.mxu0 0
    %351 = vmatpush1.bf16.msra.mxu0 0
    %352 = vmatprep.subr.bf16.mxu0 0
    %353 = vmatpush1.bf16.msra.mxu0 0
    %354 = vmatprep.mubr.bf16.mxu0 0
    %355 = vmatmul.mubr.bf16.gmra.mrb[0].mxu0 %v250
    %v356 = vpop.f32.mrb[0].mxu0
    %v357 = vadd.f32 %v272, %v356
    %v358 = vpop.f32.mrb[0].mxu0
    %v359 = vpop.f32.mrb[0].mxu0
    %v360 = vpop.f32.mrb[0].mxu0
    %361 = vdwg.mxu0
    %vm362 = vcmask 7168
    %363 = vst.msk [vmem:[%s7] sm:$0xff] %vm362, %v357
    // Predicated region
    $region46: #{tpu_custom_call.1} parent=1 // pred_check
      _
    $region47: #{tpu_custom_call.1} parent=1 // pred_check_branch
      %365 = sbr.rel (0) target = $region49
    $region48: #{tpu_custom_call.1} parent=1 // pred_region
      _
    $region49: #{tpu_custom_call.1} parent=1 // pred_fallthru
      _
    // Predicated region
    $region50: #{tpu_custom_call.1} parent=1 // pred_check
      _
    $region51: #{tpu_custom_call.1} parent=1 // pred_check_branch
      %367 = sbr.rel (0) target = $region53
    $region52: #{tpu_custom_call.1} parent=1 // pred_region
      _
    $region53: #{tpu_custom_call.1} parent=1 // pred_fallthru
      _
    %368 = vsyncpa [#allocation3], 1
    %369 = vsyncpa [#allocation5], 1
    %370 = vsyncpa [#allocation8], 1

</llo_original>
